<compile_context>
chip_gen: v5e
topology: v5e:2x2
jax: 0.10.0
libtpu: 0.0.40
codegen_flags: <defaults>
</compile_context>

<pallas_src>
import jax
import jax.numpy as jnp
from jax.experimental import pallas as pl
from jax.experimental.pallas import tpu as pltpu

_LEAKY_CF = 0.2
_BN_EPS = 1e-5


def _discriminator_kernel(z_ref, x_ref, w1_ref, b1_ref, w2_ref, b2_ref,
                          w3_ref, b3_ref, out_ref):
    zd = z_ref.shape[1]

    # Fused concat: cat([z, x], 1) @ W1 == z @ W1[:zd] + x @ W1[zd:].
    # bf16 operands, f32 MXU accumulation.
    h1 = (jnp.dot(z_ref[...], w1_ref[:zd, :],
                  preferred_element_type=jnp.float32)
          + jnp.dot(x_ref[...], w1_ref[zd:, :],
                    preferred_element_type=jnp.float32)
          + b1_ref[...])
    # LeakyReLU(0.2): max(x, 0.2*x) since 0 < cf < 1.
    h1 = jnp.maximum(h1, _LEAKY_CF * h1)

    # Linear(hidden -> hidden)
    h2 = jnp.dot(h1.astype(jnp.bfloat16), w2_ref[...],
                 preferred_element_type=jnp.float32) + b2_ref[...]

    # BatchNorm1d(hidden, affine=False), training mode: batch mean, biased
    # batch variance, eps=1e-5.  Two-pass variance for numerical safety.
    inv_b = 1.0 / h2.shape[0]
    mean = jnp.sum(h2, axis=0, keepdims=True) * inv_b
    centered = h2 - mean
    var = jnp.sum(centered * centered, axis=0, keepdims=True) * inv_b
    h2n = centered * jax.lax.rsqrt(var + _BN_EPS)

    # LeakyReLU(0.2)
    h3 = jnp.maximum(h2n, _LEAKY_CF * h2n)

    # Linear(hidden -> 1) + Sigmoid: VPU multiply + XLU reduce (an 8x128x1
    # MXU matmul would waste a full push/pop for one valid column); bias is
    # an SMEM scalar.
    o = jnp.sum(h3 * w3_ref[...], axis=-1, keepdims=True) + b3_ref[0, 0]
    out_ref[...] = jax.nn.sigmoid(o)


def bigan_discriminator_forward(z, x, params):
    """z: (B, z_dim), x: (B, ...) -> (B, 1) f32 in (0, 1)."""
    w1, b1, w2, b2, w3, b3 = params
    B = x.shape[0]
    assert B > 1, "BatchNorm1d batch statistics require batch size > 1"

    # Pre-cast activations to bf16 (MXU operand dtype); no in-kernel cast.
    z_bf = z.astype(jnp.bfloat16)
    x_bf = x.reshape(B, -1).astype(jnp.bfloat16)

    # Tiny problem: one block, everything (weights + activations) resident in
    # VMEM.  A single block preserves full-batch BatchNorm statistics.
    full = lambda a: pl.BlockSpec(a.shape, lambda: (0,) * a.ndim)
    out = pl.pallas_call(
        _discriminator_kernel,
        out_shape=jax.ShapeDtypeStruct((B, 1), jnp.float32),
        grid=(),
        in_specs=[full(z_bf), full(x_bf),
                  full(w1), full(b1), full(w2), full(b2), full(w3),
                  pl.BlockSpec(memory_space=pltpu.MemorySpace.SMEM)],
        out_specs=pl.BlockSpec((B, 1), lambda: (0, 0)),
    )(z_bf, x_bf, w1, b1, w2, b2, w3, b3)
    return out


def init_params(key, in_dim, hidden_dim):
    """Deterministic synthetic parameters (shapes match the nn.Module).

    Matmul weights are stored as (in, out) bf16; w3 is stored (1, hidden) f32
    (consumed as a VPU/XLU reduction, not an MXU matmul); biases stay f32.
    PyTorch stores (out, in) and applies x @ W.T.
    """
    k1, k2, k3, k4, k5, k6 = jax.random.split(key, 6)
    s1 = 1.0 / jnp.sqrt(in_dim)
    s2 = 1.0 / jnp.sqrt(hidden_dim)
    s3 = 1.0 / jnp.sqrt(hidden_dim)
    w1 = jax.random.uniform(k1, (in_dim, hidden_dim), jnp.float32, -s1, s1)
    b1 = jax.random.uniform(k2, (1, hidden_dim), jnp.float32, -s1, s1)
    w2 = jax.random.uniform(k3, (hidden_dim, hidden_dim), jnp.float32, -s2, s2)
    b2 = jax.random.uniform(k4, (1, hidden_dim), jnp.float32, -s2, s2)
    w3 = jax.random.uniform(k5, (1, hidden_dim), jnp.float32, -s3, s3)
    b3 = jax.random.uniform(k6, (1, 1), jnp.float32, -s3, s3)
    return (w1.astype(jnp.bfloat16), b1,
            w2.astype(jnp.bfloat16), b2,
            w3, b3)


if __name__ == "__main__":
    # Small, module-consistent shapes.
    batch = 8
    z_dim = 32
    img_sz = 16
    x_dim = img_sz * img_sz          # x is an image flattened inside forward
    hidden_dim = 128

    key = jax.random.PRNGKey(0)
    kz, kx, kp = jax.random.split(key, 3)
    z = jax.random.normal(kz, (batch, z_dim), jnp.float32)
    x = jax.random.normal(kx, (batch, 1, img_sz, img_sz), jnp.float32)
    params = init_params(kp, z_dim + x_dim, hidden_dim)

    out = bigan_discriminator_forward(z, x, params)
    out = jax.block_until_ready(out)
    assert out.shape == (batch, 1), out.shape

    # Pure-JAX reference mirroring the kernel's bf16-operand / f32-accum math.
    w1, b1, w2, b2, w3, b3 = params
    zb = z.astype(jnp.bfloat16)
    xb = x.reshape(batch, -1).astype(jnp.bfloat16)
    h1 = (jnp.dot(zb, w1[:z_dim], preferred_element_type=jnp.float32)
          + jnp.dot(xb, w1[z_dim:], preferred_element_type=jnp.float32) + b1)
    h1 = jnp.maximum(h1, _LEAKY_CF * h1)
    h2 = jnp.dot(h1.astype(jnp.bfloat16), w2,
                 preferred_element_type=jnp.float32) + b2
    mean = jnp.mean(h2, axis=0, keepdims=True)
    var = jnp.mean((h2 - mean) ** 2, axis=0, keepdims=True)
    h3 = (h2 - mean) / jnp.sqrt(var + _BN_EPS)
    h3 = jnp.maximum(h3, _LEAKY_CF * h3)
    ref = jax.nn.sigmoid(jnp.sum(h3 * w3, axis=-1, keepdims=True) + b3[0, 0])

    err = float(jnp.max(jnp.abs(out - ref)))
    assert jnp.allclose(out, ref, atol=1e-3, rtol=1e-3), err

    print("KERNEL_OK")
</pallas_src>

<mosaic_0001>
module attributes {stable_mosaic.version = 11 : i64} {
  func.func @_discriminator_kernel(%arg0: memref<8x32xbf16, #tpu.memory_space<vmem>>, %arg1: memref<8x256xbf16, #tpu.memory_space<vmem>>, %arg2: memref<288x128xbf16, #tpu.memory_space<vmem>>, %arg3: memref<1x128xf32, #tpu.memory_space<vmem>>, %arg4: memref<128x128xbf16, #tpu.memory_space<vmem>>, %arg5: memref<1x128xf32, #tpu.memory_space<vmem>>, %arg6: memref<1x128xf32, #tpu.memory_space<vmem>>, %arg7: memref<1x1xf32, #tpu.memory_space<smem>>, %arg8: memref<8x1xf32, #tpu.memory_space<vmem>>) attributes {dimension_semantics = [], scalar_prefetch = 0 : i64, scratch_operands = 0 : i64, tpu.core_type = #tpu.core_type<tc>} {
    %c0 = arith.constant 0 : index
    %c0_0 = arith.constant 0 : index
    %0 = vector.load %arg0[%c0, %c0_0] : memref<8x32xbf16, #tpu.memory_space<vmem>>, vector<8x32xbf16>
    %c0_1 = arith.constant 0 : index
    %c0_2 = arith.constant 0 : index
    %1 = vector.load %arg2[%c0_1, %c0_2] : memref<288x128xbf16, #tpu.memory_space<vmem>>, vector<32x128xbf16>
    %cst = arith.constant dense<0.000000e+00> : vector<8x128xf32>
    %2 = tpu.matmul %0, %1, %cst {dimension_numbers = #tpu.dot_dimension_numbers<[1], [0], [0], [1], [0, 0, 1, 1], [], []>} : vector<8x32xbf16>, vector<32x128xbf16>, vector<8x128xf32> -> vector<8x128xf32>
    %c0_3 = arith.constant 0 : index
    %c0_4 = arith.constant 0 : index
    %3 = vector.load %arg1[%c0_3, %c0_4] : memref<8x256xbf16, #tpu.memory_space<vmem>>, vector<8x256xbf16>
    %c32 = arith.constant 32 : index
    %c0_5 = arith.constant 0 : index
    %4 = vector.load %arg2[%c32, %c0_5] : memref<288x128xbf16, #tpu.memory_space<vmem>>, vector<256x128xbf16>
    %cst_6 = arith.constant dense<0.000000e+00> : vector<8x128xf32>
    %5 = tpu.matmul %3, %4, %cst_6 {dimension_numbers = #tpu.dot_dimension_numbers<[1], [0], [0], [1], [0, 0, 1, 1], [], []>} : vector<8x256xbf16>, vector<256x128xbf16>, vector<8x128xf32> -> vector<8x128xf32>
    %6 = arith.addf %2, %5 : vector<8x128xf32>
    %c0_7 = arith.constant 0 : index
    %c0_8 = arith.constant 0 : index
    %7 = vector.load %arg3[%c0_7, %c0_8] : memref<1x128xf32, #tpu.memory_space<vmem>>, vector<1x128xf32>
    %8 = vector.broadcast %7 : vector<1x128xf32> to vector<8x128xf32>
    %9 = arith.addf %6, %8 : vector<8x128xf32>
    %cst_9 = arith.constant 2.000000e-01 : f32
    %10 = vector.broadcast %cst_9 : f32 to vector<8x128xf32>
    %11 = arith.mulf %10, %9 : vector<8x128xf32>
    %12 = arith.maximumf %9, %11 : vector<8x128xf32>
    %13 = arith.truncf %12 : vector<8x128xf32> to vector<8x128xbf16>
    %c0_10 = arith.constant 0 : index
    %c0_11 = arith.constant 0 : index
    %14 = vector.load %arg4[%c0_10, %c0_11] : memref<128x128xbf16, #tpu.memory_space<vmem>>, vector<128x128xbf16>
    %cst_12 = arith.constant dense<0.000000e+00> : vector<8x128xf32>
    %15 = tpu.matmul %13, %14, %cst_12 {dimension_numbers = #tpu.dot_dimension_numbers<[1], [0], [0], [1], [0, 0, 1, 1], [], []>} : vector<8x128xbf16>, vector<128x128xbf16>, vector<8x128xf32> -> vector<8x128xf32>
    %c0_13 = arith.constant 0 : index
    %c0_14 = arith.constant 0 : index
    %16 = vector.load %arg5[%c0_13, %c0_14] : memref<1x128xf32, #tpu.memory_space<vmem>>, vector<1x128xf32>
    %17 = vector.broadcast %16 : vector<1x128xf32> to vector<8x128xf32>
    %18 = arith.addf %15, %17 : vector<8x128xf32>
    %cst_15 = arith.constant dense<0.000000e+00> : vector<128xf32>
    %19 = vector.multi_reduction <add>, %18, %cst_15 [0] : vector<8x128xf32> to vector<128xf32>
    %20 = vector.shape_cast %19 : vector<128xf32> to vector<1x128xf32>
    %cst_16 = arith.constant 1.250000e-01 : f32
    %21 = vector.broadcast %cst_16 : f32 to vector<1x128xf32>
    %22 = arith.mulf %20, %21 : vector<1x128xf32>
    %23 = vector.broadcast %22 : vector<1x128xf32> to vector<8x128xf32>
    %24 = arith.subf %18, %23 : vector<8x128xf32>
    %25 = arith.mulf %24, %24 : vector<8x128xf32>
    %cst_17 = arith.constant dense<0.000000e+00> : vector<128xf32>
    %26 = vector.multi_reduction <add>, %25, %cst_17 [0] : vector<8x128xf32> to vector<128xf32>
    %27 = vector.shape_cast %26 : vector<128xf32> to vector<1x128xf32>
    %cst_18 = arith.constant 1.250000e-01 : f32
    %28 = vector.broadcast %cst_18 : f32 to vector<1x128xf32>
    %29 = arith.mulf %27, %28 : vector<1x128xf32>
    %cst_19 = arith.constant 9.99999974E-6 : f32
    %30 = vector.broadcast %cst_19 : f32 to vector<1x128xf32>
    %31 = arith.addf %29, %30 : vector<1x128xf32>
    %32 = math.rsqrt %31 : vector<1x128xf32>
    %33 = vector.broadcast %32 : vector<1x128xf32> to vector<8x128xf32>
    %34 = arith.mulf %24, %33 : vector<8x128xf32>
    %cst_20 = arith.constant 2.000000e-01 : f32
    %35 = vector.broadcast %cst_20 : f32 to vector<8x128xf32>
    %36 = arith.mulf %35, %34 : vector<8x128xf32>
    %37 = arith.maximumf %34, %36 : vector<8x128xf32>
    %c0_21 = arith.constant 0 : index
    %c0_22 = arith.constant 0 : index
    %38 = vector.load %arg6[%c0_21, %c0_22] : memref<1x128xf32, #tpu.memory_space<vmem>>, vector<1x128xf32>
    %39 = vector.broadcast %38 : vector<1x128xf32> to vector<8x128xf32>
    %40 = arith.mulf %37, %39 : vector<8x128xf32>
    %cst_23 = arith.constant dense<0.000000e+00> : vector<8xf32>
    %41 = vector.multi_reduction <add>, %40, %cst_23 [1] : vector<8x128xf32> to vector<8xf32>
    %42 = vector.shape_cast %41 : vector<8xf32> to vector<8x1xf32>
    %c0_24 = arith.constant 0 : index
    %c0_25 = arith.constant 0 : index
    %43 = memref.load %arg7[%c0_24, %c0_25] : memref<1x1xf32, #tpu.memory_space<smem>>
    %44 = vector.broadcast %43 : f32 to vector<8x1xf32>
    %45 = arith.addf %42, %44 : vector<8x1xf32>
    %46 = arith.negf %45 : vector<8x1xf32>
    %47 = math.exp %46 : vector<8x1xf32>
    %cst_26 = arith.constant 1.000000e+00 : f32
    %48 = vector.broadcast %cst_26 : f32 to vector<8x1xf32>
    %49 = arith.addf %48, %47 : vector<8x1xf32>
    %50 = arith.divf %48, %49 : vector<8x1xf32>
    %c0_27 = arith.constant 0 : index
    %c0_28 = arith.constant 0 : index
    %51 = vector.load %arg8[%c0_27, %c0_28] : memref<8x1xf32, #tpu.memory_space<vmem>>, vector<8x1xf32>
    tpu.vector_store %arg8[%c0_27, %c0_28], %50 {strides = array<i32>} : memref<8x1xf32, #tpu.memory_space<vmem>>, vector<8x1xf32>,
    return
  }
}

</mosaic_0001>

<llo_original>
// kernel: tpu_custom_call.1
$region0: #{tpu_custom_call.1}
  #allocation0 [shape = 'u32[]', space=smem, size = 0x4, offset = 0x4, fixed_abs, tag = 'smem constant byte address 0x4 - core index']
  #allocation1 [shape = 'u32[72,128]{1,0:T(1,128)}', space=vmem, size = 0x9000, scoped, tag = 'internal scratch']
  #allocation2 [shape = 'f32[1,1]{1,0:T(1,128)S(6)}', space=smem, size = 0x200, scoped, tag = 'scoped memory for tpu_custom_call.1']
  %s0 = inlined_call_operand.hbm [shape: bf16[8,32], index: 0, kind: input, shape index: {}]
  %s1 = inlined_call_operand.hbm [shape: bf16[8,256], index: 1, kind: input, shape index: {}]
  %s2 = inlined_call_operand.hbm [shape: bf16[288,128], index: 2, kind: input, shape index: {}]
  %s3 = inlined_call_operand.vmem [shape: f32[1,128], index: 3, kind: input, shape index: {}]
  %s4 = inlined_call_operand.hbm [shape: bf16[128,128], index: 4, kind: input, shape index: {}]
  %s5 = inlined_call_operand.vmem [shape: f32[1,128], index: 5, kind: input, shape index: {}]
  %s6 = inlined_call_operand.vmem [shape: f32[1,128], index: 6, kind: input, shape index: {}]
  %s7 = inlined_call_operand.<no memory space> [shape: f32[1,1], index: 7, kind: input, shape index: {}]
  %s8 = inlined_call_operand.vmem [shape: f32[8,1], index: 8, kind: output, shape index: {}]
  %s9 = sld [smem:[#allocation0]]
  $region58: #{tpu_custom_call.1} parent=0
    _
  %s11 = ssub.s32 1, %s9
  %s12 = scalar_select 0, %s11, %s9
  %13 = sst [smem:[#allocation2]] %s7
  $region1: #{tpu_custom_call.1} parent=0
    #allocation3 [shape = 'u8[2048]{0}', space=vmem, size = 0x800, scoped, tag = 'input window, operand 0, single buffered']
    #allocation4 [shape = 's32[1]{0}', space=sflag, size = 0x4, scoped, tag = 'scoped memory for tpu_custom_call.1']
    #allocation5 [shape = 'u8[4096]{0}', space=vmem, size = 0x1000, scoped, tag = 'input window, operand 1, single buffered']
    #allocation6 [shape = 's32[1]{0}', space=sflag, size = 0x4, scoped, tag = 'scoped memory for tpu_custom_call.1']
    #allocation7 [shape = 'u8[73728]{0}', space=vmem, size = 0x12000, scoped, tag = 'input window, operand 2, single buffered']
    #allocation8 [shape = 'u8[32768]{0}', space=vmem, size = 0x8000, scoped, tag = 'input window, operand 4, single buffered']
    #allocation9 [shape = 's32[1]{0}', space=sflag, size = 0x4, scoped, tag = 'scoped memory for tpu_custom_call.1']
    %14 = vsyncpa [#allocation4], 0
    %15 = vsyncpa [#allocation6], 0
    %16 = vsyncpa [#allocation9], 0
    // Predicated region
    $region2: #{tpu_custom_call.1} parent=1 // pred_check
      _
    $region3: #{tpu_custom_call.1} parent=1 // pred_check_branch
      %18 = sbr.rel (0) target = $region5
    $region4: #{tpu_custom_call.1} parent=1 // pred_region
      %20 = vsyncadd [#allocation4], 0
      %s22 = sshll.u32 %s0, 4
      %s23 = int_to_ptr.hbm [resolvable:$true] %s22
      %s24 = sshll.u32 [#allocation3], 4
      %s25 = int_to_ptr.vmem [resolvable:$true] %s24
      %27 = dma.hbm_to_vmem [thread:$0]  %s23, 64, %s25, [#allocation4]
    $region5: #{tpu_custom_call.1} parent=1 // pred_fallthru
      _
    // Predicated region
    $region6: #{tpu_custom_call.1} parent=1 // pred_check
      _
    $region7: #{tpu_custom_call.1} parent=1 // pred_check_branch
      %29 = sbr.rel (0) target = $region9
    $region8: #{tpu_custom_call.1} parent=1 // pred_region
      %31 = vsyncadd [#allocation6], 0
      %s33 = sshll.u32 %s1, 4
      %s34 = int_to_ptr.hbm [resolvable:$true] %s33
      %s35 = sshll.u32 [#allocation5], 4
      %s36 = int_to_ptr.vmem [resolvable:$true] %s35
      %38 = dma.hbm_to_vmem [thread:$0]  %s34, 128, %s36, [#allocation6]
    $region9: #{tpu_custom_call.1} parent=1 // pred_fallthru
      _
    // Predicated region
    $region10: #{tpu_custom_call.1} parent=1 // pred_check
      _
    $region11: #{tpu_custom_call.1} parent=1 // pred_check_branch
      %40 = sbr.rel (0) target = $region13
    $region12: #{tpu_custom_call.1} parent=1 // pred_region
      %42 = vsyncadd [#allocation6], 0
      %s43 = sshll.u32 %s2, 4
      %s44 = int_to_ptr.hbm [resolvable:$true] %s43
      %s45 = sshll.u32 [#allocation7], 4
      %s46 = int_to_ptr.vmem [resolvable:$true] %s45
      %51 = dma.hbm_to_vmem [thread:$0]  %s44, 2304, %s46, [#allocation6], 64, 64, 4
    $region13: #{tpu_custom_call.1} parent=1 // pred_fallthru
      _
    // Predicated region
    $region14: #{tpu_custom_call.1} parent=1 // pred_check
      _
    $region15: #{tpu_custom_call.1} parent=1 // pred_check_branch
      %53 = sbr.rel (0) target = $region17
    $region16: #{tpu_custom_call.1} parent=1 // pred_region
      _
    $region17: #{tpu_custom_call.1} parent=1 // pred_fallthru
      _
    // Predicated region
    $region18: #{tpu_custom_call.1} parent=1 // pred_check
      _
    $region19: #{tpu_custom_call.1} parent=1 // pred_check_branch
      %55 = sbr.rel (0) target = $region21
    $region20: #{tpu_custom_call.1} parent=1 // pred_region
      %57 = vsyncadd [#allocation9], 0
      %s58 = sshll.u32 %s4, 4
      %s59 = int_to_ptr.hbm [resolvable:$true] %s58
      %s60 = sshll.u32 [#allocation8], 4
      %s61 = int_to_ptr.vmem [resolvable:$true] %s60
      %66 = dma.hbm_to_vmem [thread:$0]  %s59, 1024, %s61, [#allocation9], 64, 64, 4
    $region21: #{tpu_custom_call.1} parent=1 // pred_fallthru
      _
    // Predicated region
    $region22: #{tpu_custom_call.1} parent=1 // pred_check
      _
    $region23: #{tpu_custom_call.1} parent=1 // pred_check_branch
      %68 = sbr.rel (0) target = $region25
    $region24: #{tpu_custom_call.1} parent=1 // pred_region
      _
    $region25: #{tpu_custom_call.1} parent=1 // pred_fallthru
      _
    // Predicated region
    $region26: #{tpu_custom_call.1} parent=1 // pred_check
      _
    $region27: #{tpu_custom_call.1} parent=1 // pred_check_branch
      %70 = sbr.rel (0) target = $region29
    $region28: #{tpu_custom_call.1} parent=1 // pred_region
      _
    $region29: #{tpu_custom_call.1} parent=1 // pred_fallthru
      _
    // Predicated region
    $region30: #{tpu_custom_call.1} parent=1 // pred_check
      _
    $region31: #{tpu_custom_call.1} parent=1 // pred_check_branch
      %72 = sbr.rel (0) target = $region33
    $region32: #{tpu_custom_call.1} parent=1 // pred_region
      _
    $region33: #{tpu_custom_call.1} parent=1 // pred_fallthru
      _
    // Predicated region
    $region34: #{tpu_custom_call.1} parent=1 // pred_check
      _
    $region35: #{tpu_custom_call.1} parent=1 // pred_check_branch
      %74 = sbr.rel (0) target = $region37
    $region36: #{tpu_custom_call.1} parent=1 // pred_region
      %76 = dma.done [#allocation4], 64
    $region37: #{tpu_custom_call.1} parent=1 // pred_fallthru
      _
    // Predicated region
    $region38: #{tpu_custom_call.1} parent=1 // pred_check
      _
    $region39: #{tpu_custom_call.1} parent=1 // pred_check_branch
      %78 = sbr.rel (0) target = $region41
    $region40: #{tpu_custom_call.1} parent=1 // pred_region
      %80 = dma.done [#allocation6], 128
    $region41: #{tpu_custom_call.1} parent=1 // pred_fallthru
      _
    // Predicated region
    $region42: #{tpu_custom_call.1} parent=1 // pred_check
      _
    $region43: #{tpu_custom_call.1} parent=1 // pred_check_branch
      %82 = sbr.rel (0) target = $region45
    $region44: #{tpu_custom_call.1} parent=1 // pred_region
      %84 = dma.done [#allocation6], 2304
    $region45: #{tpu_custom_call.1} parent=1 // pred_fallthru
      _
    // Predicated region
    $region46: #{tpu_custom_call.1} parent=1 // pred_check
      _
    $region47: #{tpu_custom_call.1} parent=1 // pred_check_branch
      %86 = sbr.rel (0) target = $region49
    $region48: #{tpu_custom_call.1} parent=1 // pred_region
      %88 = dma.done [#allocation9], 1024
    $region49: #{tpu_custom_call.1} parent=1 // pred_fallthru
      _
    %v90 = vld [vmem:[#allocation3] sm:$0xf]
    %v91 = vld [vmem:[#allocation7] sm:$0xf]
    %v92 = vld [vmem:[#allocation7 + $0x4] sm:$0xf]
    %v93 = vld [vmem:[#allocation7 + $0x8] sm:$0xf]
    %v94 = vld [vmem:[#allocation7 + $0xc] sm:$0xf]
    %v95 = vld [vmem:[#allocation5] sm:$0xff]
    %v96 = vld [vmem:[#allocation7 + $0x10] sm:$0xf]
    %v97 = vld [vmem:[#allocation7 + $0x14] sm:$0xf]
    %v98 = vld [vmem:[#allocation7 + $0x18] sm:$0xf]
    %v99 = vld [vmem:[#allocation7 + $0x1c] sm:$0xf]
    %v100 = vld [vmem:[#allocation7 + $0x20] sm:$0xf]
    %v101 = vld [vmem:[#allocation7 + $0x24] sm:$0xf]
    %v102 = vld [vmem:[#allocation7 + $0x28] sm:$0xf]
    %v103 = vld [vmem:[#allocation7 + $0x2c] sm:$0xf]
    %v104 = vld [vmem:[#allocation7 + $0x30] sm:$0xf]
    %v105 = vld [vmem:[#allocation7 + $0x34] sm:$0xf]
    %v106 = vld [vmem:[#allocation7 + $0x38] sm:$0xf]
    %v107 = vld [vmem:[#allocation7 + $0x3c] sm:$0xf]
    %v108 = vld [vmem:[#allocation7 + $0x40] sm:$0xf]
    %v109 = vld [vmem:[#allocation7 + $0x44] sm:$0xf]
    %v110 = vld [vmem:[#allocation7 + $0x48] sm:$0xf]
    %v111 = vld [vmem:[#allocation7 + $0x4c] sm:$0xf]
    %v112 = vld [vmem:[#allocation7 + $0x50] sm:$0xf]
    %v113 = vld [vmem:[#allocation7 + $0x54] sm:$0xf]
    %v114 = vld [vmem:[#allocation7 + $0x58] sm:$0xf]
    %v115 = vld [vmem:[#allocation7 + $0x5c] sm:$0xf]
    %v116 = vld [vmem:[#allocation7 + $0x60] sm:$0xf]
    %v117 = vld [vmem:[#allocation7 + $0x64] sm:$0xf]
    %v118 = vld [vmem:[#allocation7 + $0x68] sm:$0xf]
    %v119 = vld [vmem:[#allocation7 + $0x6c] sm:$0xf]
    %v120 = vld [vmem:[#allocation7 + $0x70] sm:$0xf]
    %v121 = vld [vmem:[#allocation7 + $0x74] sm:$0xf]
    %v122 = vld [vmem:[#allocation7 + $0x78] sm:$0xf]
    %v123 = vld [vmem:[#allocation7 + $0x7c] sm:$0xf]
    %v124 = vld [vmem:[#allocation7 + $0x80] sm:$0xf]
    %v125 = vld [vmem:[#allocation7 + $0x84] sm:$0xf]
    %v126 = vld [vmem:[#allocation7 + $0x88] sm:$0xf]
    %v127 = vld [vmem:[#allocation7 + $0x8c] sm:$0xf]
    %v129 = vunpack.c.l.b16 %v95
    %v130 = vunpack.c.h.b16 %v95
    %v131 = vpack.c.b16 %v129, %v129
    %v132 = vpack.c.b16 %v130, %v130
    %v167 = vunpack.c.l.b16 %v96
    %v168 = vunpack.c.l.b16 %v97
    %v169 = vunpack.c.l.b16 %v98
    %v170 = vunpack.c.l.b16 %v99
    %v171 = vunpack.c.l.b16 %v100
    %v172 = vunpack.c.l.b16 %v101
    %v173 = vunpack.c.l.b16 %v102
    %v174 = vunpack.c.l.b16 %v103
    %v175 = vunpack.c.l.b16 %v104
    %v176 = vunpack.c.l.b16 %v105
    %v177 = vunpack.c.l.b16 %v106
    %v178 = vunpack.c.l.b16 %v107
    %v179 = vunpack.c.l.b16 %v108
    %v180 = vunpack.c.l.b16 %v109
    %v181 = vunpack.c.l.b16 %v110
    %v182 = vunpack.c.l.b16 %v111
    %v183 = vunpack.c.l.b16 %v112
    %v184 = vunpack.c.l.b16 %v113
    %v185 = vunpack.c.l.b16 %v114
    %v186 = vunpack.c.l.b16 %v115
    %v187 = vunpack.c.l.b16 %v116
    %v188 = vunpack.c.l.b16 %v117
    %v189 = vunpack.c.l.b16 %v118
    %v190 = vunpack.c.l.b16 %v119
    %v191 = vunpack.c.l.b16 %v120
    %v192 = vunpack.c.l.b16 %v121
    %v193 = vunpack.c.l.b16 %v122
    %v194 = vunpack.c.l.b16 %v123
    %v195 = vunpack.c.l.b16 %v124
    %v196 = vunpack.c.l.b16 %v125
    %v197 = vunpack.c.l.b16 %v126
    %v198 = vunpack.c.l.b16 %v127
    %v199 = vpack.c.b16 %v168, %v167
    %v200 = vpack.c.b16 %v170, %v169
    %v201 = vpack.c.b16 %v172, %v171
    %v202 = vpack.c.b16 %v174, %v173
    %v203 = vpack.c.b16 %v176, %v175
    %v204 = vpack.c.b16 %v178, %v177
    %v205 = vpack.c.b16 %v180, %v179
    %v206 = vpack.c.b16 %v182, %v181
    %v207 = vpack.c.b16 %v184, %v183
    %v208 = vpack.c.b16 %v186, %v185
    %v209 = vpack.c.b16 %v188, %v187
    %v210 = vpack.c.b16 %v190, %v189
    %v211 = vpack.c.b16 %v192, %v191
    %v212 = vpack.c.b16 %v194, %v193
    %v213 = vpack.c.b16 %v196, %v195
    %v214 = vpack.c.b16 %v198, %v197
    %231 = vmatpush.bf16.msra.mxu0 %v206
    %232 = vmatpush.bf16.msra.mxu0 %v205
    %233 = vmatpush.bf16.msra.mxu0 %v204
    %234 = vmatpush.bf16.msra.mxu0 %v203
    %235 = vmatpush.bf16.msra.mxu0 %v202
    %236 = vmatpush.bf16.msra.mxu0 %v201
    %237 = vmatpush.bf16.msra.mxu0 %v200
    %238 = vmatpush.bf16.msra.mxu0 %v199
    %239 = vmatmul.bf16.gmra.mxu0 %v131
    %v240 = vpop.f32.mrf.mxu0
    %v241 = vadd.f32 0.0, %v240
    %v242 = vpop.f32.mrf.mxu0
    %243 = vdwg.mxu0
    %244 = vmatpush.bf16.msra.mxu0 %v214
    %245 = vmatpush.bf16.msra.mxu0 %v213
    %246 = vmatpush.bf16.msra.mxu0 %v212
    %247 = vmatpush.bf16.msra.mxu0 %v211
    %248 = vmatpush.bf16.msra.mxu0 %v210
    %249 = vmatpush.bf16.msra.mxu0 %v209
    %250 = vmatpush.bf16.msra.mxu0 %v208
    %251 = vmatpush.bf16.msra.mxu0 %v207
    %252 = vmatmul.bf16.gmra.mxu0 %v132
    %v253 = vpop.f32.mrf.mxu0
    %v254 = vadd.f32 %v241, %v253
    %v255 = vpop.f32.mrf.mxu0
    %256 = vdwg.mxu0
    %v261 = vunpack.c.l.b16 %v91
    %v262 = vunpack.c.l.b16 %v92
    %v263 = vunpack.c.l.b16 %v93
    %v264 = vunpack.c.l.b16 %v94
    %v265 = vpack.c.b16 %v262, %v261
    %v266 = vpack.c.b16 %v264, %v263
    %vm269 = vcmask 261120
    %v271 = vsel %vm269, %v90, 0
    %273 = vmatpush.bf16.msra.mxu0 0
    %274 = vmatpush.bf16.msra.mxu0 0
    %275 = vmatpush.bf16.msra.mxu0 0
    %276 = vmatpush.bf16.msra.mxu0 0
    %277 = vmatpush.bf16.msra.mxu0 0
    %278 = vmatpush.bf16.msra.mxu0 0
    %279 = vmatpush.bf16.msra.mxu0 %v266
    %280 = vmatpush.bf16.msra.mxu0 %v265
    %281 = vmatmul.bf16.gmra.mxu0 %v271
    %v282 = vpop.f32.mrf.mxu0
    %v283 = vadd.f32 %v254, %v282
    %v284 = vpop.f32.mrf.mxu0
    %285 = vdwg.mxu0
    %v286 = vld [vmem:[%s3] sm:$0x1]
    %v288 = vperm.slane %v286, 0
    %v290 = vadd.f32 %v283, %v288
    %v291 = vmul.f32 %v290, 0.2
    %v292 = vmax.f32 %v290, %v291
    %v293 = vpack.c.bf16 %v292, %v292
    %v294 = vld [vmem:[#allocation8] sm:$0xf]
    %v295 = vld [vmem:[#allocation8 + $0x4] sm:$0xf]
    %v296 = vld [vmem:[#allocation8 + $0x8] sm:$0xf]
    %v297 = vld [vmem:[#allocation8 + $0xc] sm:$0xf]
    %v298 = vld [vmem:[#allocation8 + $0x10] sm:$0xf]
    %v299 = vld [vmem:[#allocation8 + $0x14] sm:$0xf]
    %v300 = vld [vmem:[#allocation8 + $0x18] sm:$0xf]
    %v301 = vld [vmem:[#allocation8 + $0x1c] sm:$0xf]
    %v302 = vld [vmem:[#allocation8 + $0x20] sm:$0xf]
    %v303 = vld [vmem:[#allocation8 + $0x24] sm:$0xf]
    %v304 = vld [vmem:[#allocation8 + $0x28] sm:$0xf]
    %v305 = vld [vmem:[#allocation8 + $0x2c] sm:$0xf]
    %v306 = vld [vmem:[#allocation8 + $0x30] sm:$0xf]
    %v307 = vld [vmem:[#allocation8 + $0x34] sm:$0xf]
    %v308 = vld [vmem:[#allocation8 + $0x38] sm:$0xf]
    %v309 = vld [vmem:[#allocation8 + $0x3c] sm:$0xf]
    %v310 = vld [vmem:[%s5] sm:$0x1]
    %v312 = vperm.slane %v310, 0
    %v330 = vunpack.c.l.b16 %v294
    %v331 = vunpack.c.l.b16 %v295
    %v332 = vunpack.c.l.b16 %v296
    %v333 = vunpack.c.l.b16 %v297
    %v334 = vunpack.c.l.b16 %v298
    %v335 = vunpack.c.l.b16 %v299
    %v336 = vunpack.c.l.b16 %v300
    %v337 = vunpack.c.l.b16 %v301
    %v338 = vunpack.c.l.b16 %v302
    %v339 = vunpack.c.l.b16 %v303
    %v340 = vunpack.c.l.b16 %v304
    %v341 = vunpack.c.l.b16 %v305
    %v342 = vunpack.c.l.b16 %v306
    %v343 = vunpack.c.l.b16 %v307
    %v344 = vunpack.c.l.b16 %v308
    %v345 = vunpack.c.l.b16 %v309
    %v346 = vpack.c.b16 %v331, %v330
    %v347 = vpack.c.b16 %v333, %v332
    %v348 = vpack.c.b16 %v335, %v334
    %v349 = vpack.c.b16 %v337, %v336
    %v350 = vpack.c.b16 %v339, %v338
    %v351 = vpack.c.b16 %v341, %v340
    %v352 = vpack.c.b16 %v343, %v342
    %v353 = vpack.c.b16 %v345, %v344
    %362 = vmatpush.bf16.msra.mxu0 %v353
    %363 = vmatpush.bf16.msra.mxu0 %v352
    %364 = vmatpush.bf16.msra.mxu0 %v351
    %365 = vmatpush.bf16.msra.mxu0 %v350
    %366 = vmatpush.bf16.msra.mxu0 %v349
    %367 = vmatpush.bf16.msra.mxu0 %v348
    %368 = vmatpush.bf16.msra.mxu0 %v347
    %369 = vmatpush.bf16.msra.mxu0 %v346
    %370 = vmatmul.bf16.gmra.mxu0 %v293
    %v371 = vpop.f32.mrf.mxu0
    %v372 = vadd.f32 %v312, %v371
    %v373 = vpop.f32.mrf.mxu0
    %374 = vdwg.mxu0
    %v375 = vrot.slane %v372, 4
    %v376 = vadd.f32 %v372, %v375
    %v377 = vrot.slane %v376, 2
    %v378 = vadd.f32 %v376, %v377
    %v379 = vrot.slane %v378, 1
    %v380 = vadd.f32 %v378, %v379
    %v381 = vmul.f32 %v380, 0.125
    %v382 = vsub.f32 %v372, %v381
    %v383 = vmul.f32 %v382, %v382
    %v384 = vrot.slane %v383, 4
    %v385 = vadd.f32 %v383, %v384
    %v386 = vrot.slane %v385, 2
    %v387 = vadd.f32 %v385, %v386
    %v388 = vrot.slane %v387, 1
    %v389 = vadd.f32 %v387, %v388
    %v390 = vmul.f32 %v389, 0.125
    %v391 = vadd.f32 %v390, 1e-05
    %v392 = vrsqrt.pop %v391
    %v393 = vmul.f32 %v392, %v391
    %v394 = vmul.f32 %v393, %v392
    %v395 = vmul.f32 0.5, %v394
    %v396 = vsub.f32 1.5, %v395
    %v397 = vmul.f32 %v392, %v396
    %vm398 = vweird.f32 %v391
    %vm399 = vweird.f32 %v392
    %vm400 = vmor %vm398, %vm399
    %v401 = vsel %vm400, %v392, %v397
    %v402 = vmul.f32 %v382, %v401
    %v403 = vmul.f32 %v402, 0.2
    %v404 = vmax.f32 %v402, %v403
    %v405 = vld [vmem:[%s6] sm:$0x1]
    %v407 = vperm.slane %v405, 0
    %v409 = vmul.f32 %v404, %v407
    %410 = vadd.xlane.f32.xlu0 %v409
    %v411 = vpop.xlane.xlu0 %410
    %s412 = sld [smem:[#allocation2]]
    %v413 = vstv %s412
    %v414 = vadd.f32 %v411, %v413
    %v415 = vxor.u32 %v414, 2147483648
    %v416 = vmul.f32 %v415, 1.442695
    %v417 = vpow.pop %v416
    %v418 = vadd.f32 %v417, 1.0
    %v419 = vrcp.pop %v418
    %v420 = vmul.f32 %v418, %v419
    %v421 = vsub.f32 1.0, %v420
    %v422 = vmul.f32 %v419, %v421
    %v423 = vadd.f32 %v419, %v422
    %vm424 = vweird.f32 %v418
    %vm425 = vweird.f32 %v419
    %vm426 = vmor %vm424, %vm425
    %v427 = vsel %vm426, %v419, %v423
    %v428 = vand.u32 2147483647, %v418
    %vm429 = vcmp.eq.f32.partialorder %v428, 8.507059e+37
    %v430 = vand.u32 %v418, 2147483648
    %v431 = vor.u32 1.1754944e-38, %v430
    %v432 = vsel %vm429, %v431, %v427
    %v433 = vmul.f32 1.0, %v432
    %vm434 = vcmask 7168
    %435 = vst.msk [vmem:[%s8] sm:$0xff] %vm434, %v433
    // Predicated region
    $region50: #{tpu_custom_call.1} parent=1 // pred_check
      _
    $region51: #{tpu_custom_call.1} parent=1 // pred_check_branch
      %437 = sbr.rel (0) target = $region53
    $region52: #{tpu_custom_call.1} parent=1 // pred_region
      _
    $region53: #{tpu_custom_call.1} parent=1 // pred_fallthru
      _
    // Predicated region
    $region54: #{tpu_custom_call.1} parent=1 // pred_check
      _
    $region55: #{tpu_custom_call.1} parent=1 // pred_check_branch
      %439 = sbr.rel (0) target = $region57
    $region56: #{tpu_custom_call.1} parent=1 // pred_region
      _
    $region57: #{tpu_custom_call.1} parent=1 // pred_fallthru
      _
    %440 = vsyncpa [#allocation4], 1
    %441 = vsyncpa [#allocation6], 1
    %442 = vsyncpa [#allocation9], 1

</llo_original>
